<compile_context>
chip_gen: v7x
topology: tpu7x:2x2x1
jax: 0.10.0
libtpu: 0.0.40
codegen_flags: <defaults>
</compile_context>

<pallas_src>
import functools

import jax
import jax.numpy as jnp
from jax.experimental import pallas as pl
from jax.experimental.pallas import tpu as pltpu


def _mask_loss_kernel(pm_ref, loss_ref, acc_ref, *, gt, inv_gt2, inv_n,
                      n_total, tn):
    """One (TB, TN) tile of pred_mask; accumulates row sums over the N axis.

    pm_ref:   VMEM (TB, TN) input dtype  -- predicted keep-mask tile
    loss_ref: VMEM (TB, 1)  float32      -- (mean - gt)^2 / gt^2 (written at last k)
    acc_ref:  VMEM (TB, 1)  float32      -- running row-sum accumulator
    """
    k = pl.program_id(1)
    nk = pl.num_programs(1)

    @pl.when(k == 0)
    def _init():
        acc_ref[...] = jnp.zeros_like(acc_ref)

    pm = pm_ref[...].astype(jnp.float32)          # f32 accumulation, bf16 HBM ok

    # Mask out-of-range lanes of the last partial N tile (static decision).
    if n_total % tn != 0:
        col = jax.lax.broadcasted_iota(jnp.int32, pm.shape, 1) + k * tn
        pm = jnp.where(col < n_total, pm, 0.0)

    acc_ref[...] += jnp.sum(pm, axis=1, keepdims=True)   # XLU lane reduce

    @pl.when(k == nk - 1)
    def _finalize():
        pred_ratio = acc_ref[...] * inv_n                 # mean over true N
        diff = pred_ratio - gt
        loss_ref[...] = (diff * diff * inv_gt2).astype(loss_ref.dtype)


def mask_loss_pallas(pred_mask, gt, *, tb_max=256, tn_max=1024):
    """loss[b] = (mean_n pred_mask[b, n] - gt)^2 / gt^2, computed on TPU."""
    B, N = pred_mask.shape
    gt = float(gt)

    # Tile sizes: full extent when small (satisfies the (8,128) rule via
    # "equals the full array dim"), otherwise hardware-friendly multiples.
    tb = B if B <= tb_max else tb_max          # 256 is a multiple of 8
    tn = N if N <= tn_max else tn_max          # 1024 is a multiple of 128
    nb = pl.cdiv(B, tb)
    nk = pl.cdiv(N, tn)

    kernel = functools.partial(
        _mask_loss_kernel,
        gt=gt,
        inv_gt2=1.0 / (gt * gt),
        inv_n=1.0 / N,
        n_total=N,
        tn=tn,
    )

    loss = pl.pallas_call(
        kernel,
        out_shape=jax.ShapeDtypeStruct((B, 1), jnp.float32),
        grid_spec=pltpu.PrefetchScalarGridSpec(
            num_scalar_prefetch=0,
            grid=(nb, nk),                                   # reduction axis last
            in_specs=[pl.BlockSpec((tb, tn), lambda b, k: (b, k))],
            out_specs=pl.BlockSpec((tb, 1), lambda b, k: (b, 0)),
            scratch_shapes=[pltpu.VMEM((tb, 1), jnp.float32)],
        ),
        compiler_params=pltpu.CompilerParams(
            dimension_semantics=("parallel", "arbitrary")),  # batch across TCs on v7x
    )(pred_mask)

    return loss[:, 0]


class MaskLoss:
    """JAX/Pallas port of models.masking.MaskLoss (forward semantics)."""

    def __init__(self, pruning_loc, token_ratio):
        self.pruning_loc = pruning_loc
        self.token_ratio = token_ratio

    def __call__(self, pred_mask, pruning_index):
        if pruning_index not in self.pruning_loc:
            raise ValueError('this index is not in pruning')
        index = self.pruning_loc.index(pruning_index)
        gt = self.token_ratio[index]                 # static Python float
        # (The PyTorch module print()s pred_ratio / mask_loss; omitted.)
        return mask_loss_pallas(pred_mask, gt)


if __name__ == "__main__":
    key = jax.random.PRNGKey(0)

    pruning_loc = [3, 6, 9]
    token_ratio = [0.7, 0.49, 0.343]
    module = MaskLoss(pruning_loc, token_ratio)
    gt = jnp.float32(token_ratio[1])

    # --- small shape consistent with the module: batch=2, seq=16 tokens ---
    B, N = 2, 16
    pred_mask = jax.random.uniform(key, (B, N), dtype=jnp.float32)

    out = module(pred_mask, pruning_index=6)
    out = jax.block_until_ready(out)

    ref_loss = (pred_mask.mean(axis=1) - gt) ** 2 / gt ** 2
    assert out.shape == (B,)
    assert jnp.allclose(out, ref_loss, atol=1e-5, rtol=1e-5)

    # --- exercise the tiled / masked-N path (multiple k tiles, partial tile) ---
    B2, N2 = 12, 2500
    pm2 = jax.random.uniform(jax.random.PRNGKey(1), (B2, N2), dtype=jnp.float32)
    out2 = jax.block_until_ready(module(pm2, pruning_index=6))
    ref2 = (pm2.mean(axis=1) - gt) ** 2 / gt ** 2
    assert jnp.allclose(out2, ref2, atol=1e-5, rtol=1e-5)

    # --- bf16 passthrough (no wrapper upcast; f32 accumulation in-kernel) ---
    pm_bf16 = pred_mask.astype(jnp.bfloat16)
    out_bf16 = jax.block_until_ready(module(pm_bf16, pruning_index=6))
    ref_bf16 = (pm_bf16.astype(jnp.float32).mean(axis=1) - gt) ** 2 / gt ** 2
    assert jnp.allclose(out_bf16, ref_bf16, atol=1e-3, rtol=1e-2)

    print("KERNEL_OK")
</pallas_src>

<mosaic_0001>
module attributes {stable_mosaic.version = 11 : i64} {
  func.func @_mask_loss_kernel(%arg0: i32, %arg1: i32, %arg2: memref<2x16xf32, #tpu.memory_space<vmem>>, %arg3: memref<2x1xf32, #tpu.memory_space<vmem>>, %arg4: memref<2x1xf32, #tpu.memory_space<vmem>>) attributes {dimension_semantics = [#tpu.dimension_semantics<parallel>, #tpu.dimension_semantics<arbitrary>], iteration_bounds = array<i64: 1, 1>, scalar_prefetch = 0 : i64, scratch_operands = 1 : i64, tpu.core_type = #tpu.core_type<tc>, window_params = [{transform_indices = @transform_0, window_bounds = array<i64: 2, 16>}, {transform_indices = @transform_1, window_bounds = array<i64: 2, 1>}]} {
    %c0_i32 = arith.constant 0 : i32
    %0 = arith.cmpi eq, %arg1, %c0_i32 : i32
    %1 = arith.extui %0 : i1 to i32
    %c0_i32_0 = arith.constant 0 : i32
    %2 = arith.cmpi ne, %1, %c0_i32_0 : i32
    scf.if %2 {
      %cst_8 = arith.constant 0.000000e+00 : f32
      %12 = vector.broadcast %cst_8 : f32 to vector<2x1xf32>
      %c0_9 = arith.constant 0 : index
      %c0_10 = arith.constant 0 : index
      %13 = vector.load %arg4[%c0_9, %c0_10] : memref<2x1xf32, #tpu.memory_space<vmem>>, vector<2x1xf32>
      tpu.vector_store %arg4[%c0_9, %c0_10], %12 {strides = array<i32>} : memref<2x1xf32, #tpu.memory_space<vmem>>, vector<2x1xf32>,
    } else {
    }
    %c0 = arith.constant 0 : index
    %c0_1 = arith.constant 0 : index
    %3 = vector.load %arg2[%c0, %c0_1] : memref<2x16xf32, #tpu.memory_space<vmem>>, vector<2x16xf32>
    %c0_2 = arith.constant 0 : index
    %c0_3 = arith.constant 0 : index
    %4 = vector.load %arg4[%c0_2, %c0_3] : memref<2x1xf32, #tpu.memory_space<vmem>>, vector<2x1xf32>
    %cst = arith.constant dense<0.000000e+00> : vector<2xf32>
    %5 = vector.multi_reduction <add>, %3, %cst [1] : vector<2x16xf32> to vector<2xf32>
    %6 = vector.shape_cast %5 : vector<2xf32> to vector<2x1xf32>
    %7 = arith.addf %4, %6 : vector<2x1xf32>
    %c0_4 = arith.constant 0 : index
    %c0_5 = arith.constant 0 : index
    %8 = vector.load %arg4[%c0_4, %c0_5] : memref<2x1xf32, #tpu.memory_space<vmem>>, vector<2x1xf32>
    tpu.vector_store %arg4[%c0_4, %c0_5], %7 {strides = array<i32>} : memref<2x1xf32, #tpu.memory_space<vmem>>, vector<2x1xf32>,
    %c0_i32_6 = arith.constant 0 : i32
    %9 = arith.cmpi eq, %arg1, %c0_i32_6 : i32
    %10 = arith.extui %9 : i1 to i32
    %c0_i32_7 = arith.constant 0 : i32
    %11 = arith.cmpi ne, %10, %c0_i32_7 : i32
    scf.if %11 {
      %c0_8 = arith.constant 0 : index
      %c0_9 = arith.constant 0 : index
      %12 = vector.load %arg4[%c0_8, %c0_9] : memref<2x1xf32, #tpu.memory_space<vmem>>, vector<2x1xf32>
      %cst_10 = arith.constant 6.250000e-02 : f32
      %13 = vector.broadcast %cst_10 : f32 to vector<2x1xf32>
      %14 = arith.mulf %12, %13 : vector<2x1xf32>
      %cst_11 = arith.constant 4.900000e-01 : f32
      %15 = vector.broadcast %cst_11 : f32 to vector<2x1xf32>
      %16 = arith.subf %14, %15 : vector<2x1xf32>
      %17 = arith.mulf %16, %16 : vector<2x1xf32>
      %cst_12 = arith.constant 4.1649313 : f32
      %18 = vector.broadcast %cst_12 : f32 to vector<2x1xf32>
      %19 = arith.mulf %17, %18 : vector<2x1xf32>
      %c0_13 = arith.constant 0 : index
      %c0_14 = arith.constant 0 : index
      %20 = vector.load %arg3[%c0_13, %c0_14] : memref<2x1xf32, #tpu.memory_space<vmem>>, vector<2x1xf32>
      tpu.vector_store %arg3[%c0_13, %c0_14], %19 {strides = array<i32>} : memref<2x1xf32, #tpu.memory_space<vmem>>, vector<2x1xf32>,
    } else {
    }
    return
  }
  func.func @transform_0(%arg0: i32, %arg1: i32) -> (i32, i32) {
    %c0_i32 = arith.constant 0 : i32
    return %arg0, %arg1 : i32, i32
  }
  func.func @transform_1(%arg0: i32, %arg1: i32) -> (i32, i32) {
    %c0_i32 = arith.constant 0 : i32
    %c0_i32_0 = arith.constant 0 : i32
    return %arg0, %c0_i32 : i32, i32
  }
}

</mosaic_0001>

<llo_original>
// kernel: tpu_custom_call.1
$region0: #{tpu_custom_call.1}
  #allocation0 [shape = 'u32[]', space=smem, size = 0x4, offset = 0x4, fixed_abs, tag = 'smem constant byte address 0x4 - core index']
  #allocation1 [shape = 'u32[144,128]{1,0:T(1,128)}', space=vmem, size = 0x12000, scoped, tag = 'internal scratch']
  #allocation2 [shape = 'f32[2,1]{1,0:T(2,128)}', space=vmem, size = 0x400, scoped, tag = 'scratch operand']
  %s0 = inlined_call_operand.hbm [shape: f32[2,16], index: 0, kind: input, shape index: {}]
  %s1 = inlined_call_operand.vmem [shape: f32[2,1], index: 1, kind: output, shape index: {}]
  %s2 = sld [smem:[#allocation0]]
  $region26: #{tpu_custom_call.1} parent=0
    _
  %s4 = ssub.s32 1, %s2
  %s5 = scalar_select 0, %s4, %s2
  $region1: #{tpu_custom_call.1} parent=0
    #allocation3 [shape = 'u8[1024]{0}', space=vmem, size = 0x400, scoped, tag = 'input window, operand 0, single buffered']
    #allocation4 [shape = 's32[1]{0}', space=sflag, size = 0x4, scoped, tag = 'scoped memory for tpu_custom_call.1']
    %6 = vsyncpa [#allocation4], 0
    // Predicated region
    $region2: #{tpu_custom_call.1} parent=1 // pred_check
      _
    $region3: #{tpu_custom_call.1} parent=1 // pred_check_branch
      %8 = sbr.rel (0) target = $region5
    $region4: #{tpu_custom_call.1} parent=1 // pred_region
      %s10 = ssub.s32 32, 32
      %11 = vsyncadd [#allocation4], %s10
      %s13 = sshll.u32 [#allocation3], 4
      %s14 = int_to_ptr.vmem [resolvable:$true] %s13
      %16 = dma.hbm_to_vmem [thread:$0]  %s0, 32, %s14, [#allocation4]
    $region5: #{tpu_custom_call.1} parent=1 // pred_fallthru
      _
    // Predicated region
    $region6: #{tpu_custom_call.1} parent=1 // pred_check
      _
    $region7: #{tpu_custom_call.1} parent=1 // pred_check_branch
      %18 = sbr.rel (0) target = $region9
    $region8: #{tpu_custom_call.1} parent=1 // pred_region
      %19 = dma.done [#allocation4], 32
    $region9: #{tpu_custom_call.1} parent=1 // pred_fallthru
      _
    %p20 = scmp.eq.s32.totalorder 0, 0
    // Predicated region
    $region10: #{tpu_custom_call.1} parent=1 // pred_check
      %p21 = pneg %p20
    $region11: #{tpu_custom_call.1} parent=1 // pred_check_branch
      %23 = sbr.rel (%p21) target = $region13
    $region12: #{tpu_custom_call.1} parent=1 // pred_region
      %vm24 = vcmask 1024
      %25 = vst.msk [vmem:[#allocation2] sm:$0x3] %vm24, 0.0
    $region13: #{tpu_custom_call.1} parent=1 // pred_fallthru
      _
    %v26 = vld [vmem:[#allocation3] sm:$0x3]
    %v27 = vld [vmem:[#allocation2] sm:$0x3]
    %vm28 = vcmask 123904
    %v29 = vsel %vm28, %v26, 0.0
    %30 = vadd.xlane.f32.xlu0 %v29
    %v31 = vpop.xlane.xlu0 %30
    %v32 = vadd.f32 %v27, %v31
    %vm33 = vcmask 1024
    %34 = vst.msk [vmem:[#allocation2] sm:$0x3] %vm33, %v32
    // Predicated region
    $region14: #{tpu_custom_call.1} parent=1 // pred_check
      %p35 = pneg %p20
    $region15: #{tpu_custom_call.1} parent=1 // pred_check_branch
      %37 = sbr.rel (%p35) target = $region17
    $region16: #{tpu_custom_call.1} parent=1 // pred_region
      %v38 = vld [vmem:[#allocation2] sm:$0x3]
      %v39 = vmul.f32 %v38, 0.0625
      %v40 = vsub.f32 %v39, 0.49
      %v41 = vmul.f32 %v40, %v40
      %v42 = vmul.f32 %v41, 4.1649313
      %43 = vst.msk [vmem:[%s1] sm:$0x3] %vm33, %v42
    $region17: #{tpu_custom_call.1} parent=1 // pred_fallthru
      _
    // Predicated region
    $region18: #{tpu_custom_call.1} parent=1 // pred_check
      _
    $region19: #{tpu_custom_call.1} parent=1 // pred_check_branch
      %45 = sbr.rel (0) target = $region21
    $region20: #{tpu_custom_call.1} parent=1 // pred_region
      _
    $region21: #{tpu_custom_call.1} parent=1 // pred_fallthru
      _
    // Predicated region
    $region22: #{tpu_custom_call.1} parent=1 // pred_check
      _
    $region23: #{tpu_custom_call.1} parent=1 // pred_check_branch
      %47 = sbr.rel (0) target = $region25
    $region24: #{tpu_custom_call.1} parent=1 // pred_region
      _
    $region25: #{tpu_custom_call.1} parent=1 // pred_fallthru
      _
    %48 = vsyncpa [#allocation4], 1

</llo_original>
